<compile_context>
chip_gen: v5e
topology: v5e:2x2
jax: 0.10.0
libtpu: 0.0.40
codegen_flags: <defaults>
</compile_context>

<pallas_src>
import functools

import numpy as np
import jax
import jax.numpy as jnp
from jax import lax
from jax.experimental import pallas as pl
from jax.experimental.pallas import tpu as pltpu


# ------------------------------------------------------------- Pallas kernel
def _blur_kernel(coef_ref, x_ref, o_ref, *, W, t1):
    # coef_ref: (4, HW) resident tap*mask coefficient planes
    #   row 0: t0 where the "up"    neighbour (p - W) is in-image, else 0
    #   row 1: t2 where the "down"  neighbour (p + W) is in-image, else 0
    #   row 2: t0 where the "left"  neighbour (p - 1) is in-image, else 0
    #   row 3: t2 where the "right" neighbour (p + 1) is in-image, else 0
    # x_ref / o_ref: (R_TILE, HW) — N*C rows on sublanes, flattened spatial
    # (lane-dense) on lanes.  All boundary handling is baked into coef.
    x = x_ref[...]
    hw = x.shape[-1]

    c_up = coef_ref[0:1, :]
    c_dn = coef_ref[1:2, :]
    c_lf = coef_ref[2:3, :]
    c_rt = coef_ref[3:4, :]

    # Vertical pass: v[p] = t0*x[p-W] + t1*x[p] + t2*x[p+W]
    # pltpu.roll(x, s)[p] == x[(p - s) mod HW]; wrapped entries are killed by
    # the zero entries of the coefficient planes.
    up = pltpu.roll(x, W, axis=1)           # x[p - W]
    dn = pltpu.roll(x, hw - W, axis=1)      # x[p + W]
    v = c_up * up + t1 * x + c_dn * dn

    # Horizontal pass: o[p] = t0*v[p-1] + t1*v[p] + t2*v[p+1]
    lf = pltpu.roll(v, 1, axis=1)           # v[p - 1]
    rt = pltpu.roll(v, hw - 1, axis=1)      # v[p + 1]
    o_ref[...] = (c_lf * lf + t1 * v + c_rt * rt).astype(o_ref.dtype)


# ------------------------------------------------------------------- wrapper
def blur_layer_pallas(x, kernel=(1.0, 2.0, 1.0), normalize=True, flip=False,
                      stride=1):
    """BlurLayer.forward.  x: (N, C, H, W) -> (N, C, H, W)."""
    assert stride == 1  # TODO(synk): stride > 1 path not implemented.
    N, C, H, W = x.shape
    HW = H * W
    NC = N * C
    itemsize = np.dtype(x.dtype).itemsize

    # Separable taps (outer(k,k)/sum(outer) == outer(k/s, k/s)).
    k = np.asarray(kernel, dtype=np.float32)
    assert k.shape == (3,)
    if normalize:
        k = k / k.sum()
    if flip:
        k = k[::-1].copy()
    t0, t1, t2 = (float(v) for v in k)

    # Precompute tap*mask coefficient planes once (trace-time numpy); passed
    # as a tiny resident input so the kernel does zero mask arithmetic.
    p = np.arange(HW)
    col = p % W
    coef = np.zeros((4, HW), dtype=np.float32)
    coef[0] = np.where(p >= W, t0, 0.0)           # up neighbour valid
    coef[1] = np.where(p < HW - W, t2, 0.0)       # down neighbour valid
    coef[2] = np.where(col != 0, t0, 0.0)         # left neighbour valid
    coef[3] = np.where(col != W - 1, t2, 0.0)     # right neighbour valid
    coef = jnp.asarray(coef, dtype=x.dtype)

    # Tile the collapsed N*C row axis: ~1 MiB per input buffer, R_TILE a
    # multiple of 8 (f32 sublane tile), and prefer >= 8 grid steps so the
    # pipeline overlaps DMA with compute and both v7x cores get work.
    bytes_per_row = HW * itemsize
    rows_for_bytes = max(1, (1 << 20) // bytes_per_row)
    rows_for_steps = max(1, NC // 8)
    r = (min(rows_for_bytes, rows_for_steps) // 8) * 8
    R_TILE = max(8, r)
    if R_TILE >= NC:
        R_TILE = NC            # single full-extent block (always legal)
    grid = (pl.cdiv(NC, R_TILE),)

    tile_bytes = R_TILE * HW * itemsize
    # 2x2 I/O double buffers + roll/intermediate temporaries; cap at v7x's
    # 64 MiB physical VMEM, floor at the v6e/v7x scoped default.
    vmem_limit = int(min(64 << 20, max(32 << 20, 12 * tile_bytes)))

    x_flat = x.reshape(NC, HW)                    # free reshape (contiguous)
    kern = functools.partial(_blur_kernel, W=W, t1=t1)

    out = pl.pallas_call(
        kern,
        out_shape=jax.ShapeDtypeStruct((NC, HW), x.dtype),
        grid=grid,
        in_specs=[
            # Constant block index -> DMA'd once, stays resident in VMEM.
            pl.BlockSpec((4, HW), lambda i: (0, 0)),
            pl.BlockSpec((R_TILE, HW), lambda i: (i, 0)),
        ],
        out_specs=pl.BlockSpec((R_TILE, HW), lambda i: (i, 0)),
        compiler_params=pltpu.CompilerParams(
            dimension_semantics=("parallel",),
            vmem_limit_bytes=vmem_limit),
        cost_estimate=pl.CostEstimate(
            flops=10 * NC * HW,                       # 6 mul + 4 add / element
            transcendentals=0,
            bytes_accessed=(2 * NC * HW + 4 * HW) * itemsize),
    )(coef, x_flat)
    return out.reshape(N, C, H, W)


# --------------------------------------------------------- pure-JAX reference
def blur_layer_reference(x, kernel=(1.0, 2.0, 1.0), normalize=True, flip=False,
                         stride=1):
    C = x.shape[1]
    k = np.asarray(kernel, dtype=np.float32)
    k2 = k[:, None] * k[None, :]
    if normalize:
        k2 = k2 / k2.sum()
    if flip:
        k2 = k2[::-1, ::-1].copy()
    kw = jnp.tile(jnp.asarray(k2, dtype=x.dtype).reshape(1, 1, 3, 3),
                  (C, 1, 1, 1))
    return lax.conv_general_dilated(
        x, kw, window_strides=(stride, stride), padding=[(1, 1), (1, 1)],
        dimension_numbers=("NCHW", "OIHW", "NCHW"), feature_group_count=C)


# ----------------------------------------------------------------------- main
if __name__ == "__main__":
    key = jax.random.PRNGKey(0)

    # Primary check (small StyleGAN-like shape).
    N, C, H, W = 2, 4, 16, 16
    x = jax.random.normal(key, (N, C, H, W), jnp.float32)
    fwd = jax.jit(blur_layer_pallas)
    out = jax.block_until_ready(fwd(x))
    ref = jax.block_until_ready(blur_layer_reference(x))
    assert out.shape == (N, C, H, W)
    np.testing.assert_allclose(np.asarray(out), np.asarray(ref),
                               rtol=1e-5, atol=1e-5)

    # Non-square (H != W) check with N*C not a multiple of 8.
    x2 = jax.random.normal(jax.random.PRNGKey(1), (1, 5, 12, 32), jnp.float32)
    out2 = jax.block_until_ready(jax.jit(blur_layer_pallas)(x2))
    ref2 = jax.block_until_ready(blur_layer_reference(x2))
    np.testing.assert_allclose(np.asarray(out2), np.asarray(ref2),
                               rtol=1e-5, atol=1e-5)

    print("KERNEL_OK")
</pallas_src>

<mosaic_0001>
module attributes {stable_mosaic.version = 11 : i64} {
  func.func @_blur_kernel(%arg0: i32, %arg1: memref<4x256xf32, #tpu.memory_space<vmem>>, %arg2: memref<8x256xf32, #tpu.memory_space<vmem>>, %arg3: memref<8x256xf32, #tpu.memory_space<vmem>>) attributes {dimension_semantics = [#tpu.dimension_semantics<parallel>], iteration_bounds = array<i64: 1>, scalar_prefetch = 0 : i64, scratch_operands = 0 : i64, tpu.core_type = #tpu.core_type<tc>, window_params = [{pipeline_mode = #tpu.pipeline_mode<synchronous>, transform_indices = @transform_0, window_bounds = array<i64: 4, 256>}, {transform_indices = @transform_1, window_bounds = array<i64: 8, 256>}, {transform_indices = @transform_2, window_bounds = array<i64: 8, 256>}]} {
    %c0 = arith.constant 0 : index
    %c0_0 = arith.constant 0 : index
    %0 = vector.load %arg2[%c0, %c0_0] : memref<8x256xf32, #tpu.memory_space<vmem>>, vector<8x256xf32>
    %c0_1 = arith.constant 0 : index
    %c0_2 = arith.constant 0 : index
    %1 = vector.load %arg1[%c0_1, %c0_2] : memref<4x256xf32, #tpu.memory_space<vmem>>, vector<1x256xf32>
    %c1 = arith.constant 1 : index
    %c0_3 = arith.constant 0 : index
    %2 = vector.load %arg1[%c1, %c0_3] : memref<4x256xf32, #tpu.memory_space<vmem>>, vector<1x256xf32>
    %c2 = arith.constant 2 : index
    %c0_4 = arith.constant 0 : index
    %3 = vector.load %arg1[%c2, %c0_4] : memref<4x256xf32, #tpu.memory_space<vmem>>, vector<1x256xf32>
    %c3 = arith.constant 3 : index
    %c0_5 = arith.constant 0 : index
    %4 = vector.load %arg1[%c3, %c0_5] : memref<4x256xf32, #tpu.memory_space<vmem>>, vector<1x256xf32>
    %c16_i32 = arith.constant 16 : i32
    %5 = tpu.dynamic_rotate %0 by %c16_i32 dim 1 : vector<8x256xf32>, i32 -> vector<8x256xf32>
    %c240_i32 = arith.constant 240 : i32
    %6 = tpu.dynamic_rotate %0 by %c240_i32 dim 1 : vector<8x256xf32>, i32 -> vector<8x256xf32>
    %7 = vector.broadcast %1 : vector<1x256xf32> to vector<8x256xf32>
    %8 = arith.mulf %7, %5 : vector<8x256xf32>
    %cst = arith.constant 5.000000e-01 : f32
    %9 = vector.broadcast %cst : f32 to vector<8x256xf32>
    %10 = arith.mulf %9, %0 : vector<8x256xf32>
    %11 = arith.addf %8, %10 : vector<8x256xf32>
    %12 = vector.broadcast %2 : vector<1x256xf32> to vector<8x256xf32>
    %13 = arith.mulf %12, %6 : vector<8x256xf32>
    %14 = arith.addf %11, %13 : vector<8x256xf32>
    %c1_i32 = arith.constant 1 : i32
    %15 = tpu.dynamic_rotate %14 by %c1_i32 dim 1 : vector<8x256xf32>, i32 -> vector<8x256xf32>
    %c255_i32 = arith.constant 255 : i32
    %16 = tpu.dynamic_rotate %14 by %c255_i32 dim 1 : vector<8x256xf32>, i32 -> vector<8x256xf32>
    %17 = vector.broadcast %3 : vector<1x256xf32> to vector<8x256xf32>
    %18 = arith.mulf %17, %15 : vector<8x256xf32>
    %cst_6 = arith.constant 5.000000e-01 : f32
    %19 = vector.broadcast %cst_6 : f32 to vector<8x256xf32>
    %20 = arith.mulf %19, %14 : vector<8x256xf32>
    %21 = arith.addf %18, %20 : vector<8x256xf32>
    %22 = vector.broadcast %4 : vector<1x256xf32> to vector<8x256xf32>
    %23 = arith.mulf %22, %16 : vector<8x256xf32>
    %24 = arith.addf %21, %23 : vector<8x256xf32>
    %c0_7 = arith.constant 0 : index
    %c0_8 = arith.constant 0 : index
    %25 = vector.load %arg3[%c0_7, %c0_8] : memref<8x256xf32, #tpu.memory_space<vmem>>, vector<8x256xf32>
    tpu.vector_store %arg3[%c0_7, %c0_8], %24 {strides = array<i32>} : memref<8x256xf32, #tpu.memory_space<vmem>>, vector<8x256xf32>,
    return
  }
  func.func @transform_0(%arg0: i32) -> (i32, i32) {
    %c0_i32 = arith.constant 0 : i32
    %c0_i32_0 = arith.constant 0 : i32
    %c0_i32_1 = arith.constant 0 : i32
    return %c0_i32, %c0_i32_0 : i32, i32
  }
  func.func @transform_1(%arg0: i32) -> (i32, i32) {
    %c0_i32 = arith.constant 0 : i32
    %c0_i32_0 = arith.constant 0 : i32
    return %arg0, %c0_i32 : i32, i32
  }
  func.func @transform_2(%arg0: i32) -> (i32, i32) {
    %c0_i32 = arith.constant 0 : i32
    %c0_i32_0 = arith.constant 0 : i32
    return %arg0, %c0_i32 : i32, i32
  }
}

</mosaic_0001>

<llo_original>
// kernel: blur_layer_pallas.1
$region0: #{blur_layer_pallas.1}
  #allocation0 [shape = 'u32[]', space=smem, size = 0x4, offset = 0x4, fixed_abs, tag = 'smem constant byte address 0x4 - core index']
  #allocation1 [shape = 'u32[72,128]{1,0:T(1,128)}', space=vmem, size = 0x9000, scoped, tag = 'internal scratch']
  %s0 = inlined_call_operand.vmem [shape: f32[4,256], index: 0, kind: input, shape index: {}]
  %s1 = inlined_call_operand.vmem [shape: f32[8,256], index: 1, kind: input, shape index: {}]
  %s2 = inlined_call_operand.vmem [shape: f32[8,256], index: 2, kind: output, shape index: {}]
  %s3 = sld [smem:[#allocation0]]
  $region18: #{blur_layer_pallas.1} parent=0
    _
  %s5 = ssub.s32 1, %s3
  %s6 = scalar_select 0, %s5, %s3
  // Predicated region
  $region2: #{blur_layer_pallas.1} parent=0 // pred_check
    _
  $region3: #{blur_layer_pallas.1} parent=0 // pred_check_branch
    %8 = sbr.rel (0) target = $region5
  $region4: #{blur_layer_pallas.1} parent=0 // pred_region
    _
  $region5: #{blur_layer_pallas.1} parent=0 // pred_fallthru
    _
  // Predicated region
  $region6: #{blur_layer_pallas.1} parent=0 // pred_check
    _
  $region7: #{blur_layer_pallas.1} parent=0 // pred_check_branch
    %10 = sbr.rel (0) target = $region9
  $region8: #{blur_layer_pallas.1} parent=0 // pred_region
    _
  $region9: #{blur_layer_pallas.1} parent=0 // pred_fallthru
    _
  %v11 = vld [vmem:[%s1] sm:$0xff]
  %v12 = vld [vmem:[%s1 + $0x8] sm:$0xff]
  %v13 = vld [vmem:[%s0] ss:$4 sm:$0x3]
  %s14 = scalar_lea.vmem %s0, 1
  %v15 = vld [vmem:[%s14] ss:$4 sm:$0x3]
  %s16 = scalar_lea.vmem %s0, 2
  %v17 = vld [vmem:[%s16] ss:$4 sm:$0x3]
  %s18 = scalar_lea.vmem %s0, 3
  %v19 = vld [vmem:[%s18] ss:$4 sm:$0x3]
  %20 = vrot.lane.b32.xlu0 %v11, 16
  %v21 = vpop.permute.xlu0 %20
  %22 = vrot.lane.b32.xlu0 %v12, 16
  %v23 = vpop.permute.xlu0 %22
  %v24 = vlaneseq
  %v25 = vand.u32 %v24, 127
  %vm26 = vcmp.lt.s32.totalorder %v25, 16
  %v27 = vsel %vm26, %v21, %v23
  %v28 = vsel %vm26, %v23, %v21
  %29 = vrot.lane.b32.xlu0 %v11, 112
  %v30 = vpop.permute.xlu0 %29
  %31 = vrot.lane.b32.xlu0 %v12, 112
  %v32 = vpop.permute.xlu0 %31
  %vm33 = vcmp.lt.s32.totalorder %v25, 112
  %v34 = vsel %vm33, %v30, %v32
  %v35 = vsel %vm33, %v32, %v30
  %v37 = vperm.slane %v13, 0
  %v38 = vperm.slane %v13, 1
  %v41 = vmul.f32 %v37, %v28
  %v42 = vmul.f32 %v38, %v27
  %v43 = vmul.f32 %v11, 0.5
  %v44 = vmul.f32 %v12, 0.5
  %v45 = vadd.f32 %v41, %v43
  %v46 = vadd.f32 %v42, %v44
  %v48 = vperm.slane %v15, 0
  %v49 = vperm.slane %v15, 1
  %v52 = vmul.f32 %v48, %v34
  %v53 = vmul.f32 %v49, %v35
  %v54 = vadd.f32 %v45, %v52
  %v55 = vadd.f32 %v46, %v53
  %56 = vrot.lane.b32.xlu0 %v54, 1
  %v57 = vpop.permute.xlu0 %56
  %58 = vrot.lane.b32.xlu0 %v55, 1
  %v59 = vpop.permute.xlu0 %58
  %vm60 = vcmp.lt.s32.totalorder %v25, 1
  %v61 = vsel %vm60, %v57, %v59
  %v62 = vsel %vm60, %v59, %v57
  %63 = vrot.lane.b32.xlu0 %v54, 127
  %v64 = vpop.permute.xlu0 %63
  %65 = vrot.lane.b32.xlu0 %v55, 127
  %v66 = vpop.permute.xlu0 %65
  %vm67 = vcmp.lt.s32.totalorder %v25, 127
  %v68 = vsel %vm67, %v64, %v66
  %v69 = vsel %vm67, %v66, %v64
  %v71 = vperm.slane %v17, 0
  %v72 = vperm.slane %v17, 1
  %v75 = vmul.f32 %v71, %v62
  %v76 = vmul.f32 %v72, %v61
  %v77 = vmul.f32 %v54, 0.5
  %v78 = vmul.f32 %v55, 0.5
  %v79 = vadd.f32 %v75, %v77
  %v80 = vadd.f32 %v76, %v78
  %v82 = vperm.slane %v19, 0
  %v83 = vperm.slane %v19, 1
  %v86 = vmul.f32 %v82, %v68
  %v87 = vmul.f32 %v83, %v69
  %v88 = vadd.f32 %v79, %v86
  %v89 = vadd.f32 %v80, %v87
  %90 = vst [vmem:[%s2] sm:$0xff] %v88
  %91 = vst [vmem:[%s2 + $0x8] sm:$0xff] %v89
  // Predicated region
  $region10: #{blur_layer_pallas.1} parent=0 // pred_check
    _
  $region11: #{blur_layer_pallas.1} parent=0 // pred_check_branch
    %93 = sbr.rel (0) target = $region13
  $region12: #{blur_layer_pallas.1} parent=0 // pred_region
    _
  $region13: #{blur_layer_pallas.1} parent=0 // pred_fallthru
    _
  // Predicated region
  $region14: #{blur_layer_pallas.1} parent=0 // pred_check
    _
  $region15: #{blur_layer_pallas.1} parent=0 // pred_check_branch
    %95 = sbr.rel (0) target = $region17
  $region16: #{blur_layer_pallas.1} parent=0 // pred_region
    _
  $region17: #{blur_layer_pallas.1} parent=0 // pred_fallthru
    _

</llo_original>
